<compile_context>
chip_gen: v7x
topology: tpu7x:2x2x1
jax: 0.10.0
libtpu: 0.0.40
codegen_flags: <defaults>
</compile_context>

<pallas_src>
import functools

import jax
import jax.numpy as jnp
from jax.experimental import pallas as pl
from jax.experimental.pallas import tpu as pltpu

LEAKY_SLOPE = 0.2
BN_EPS = 1e-5
NEG_INF = -1e9          # additive mask value for disconnected node pairs
MINUS_BIG = -1e30       # online-softmax running-max init (finite -> no inf-inf NaNs)


def _leaky(z):
    return jnp.where(z > 0, z, LEAKY_SLOPE * z)


def _vmem_limit_bytes():
    """~half the physical VMEM: 64 MiB on v5e/v6e (128 MiB), 32 MiB on v7x (64 MiB)."""
    try:
        cap = pltpu.get_tpu_info().vmem_capacity_bytes
    except Exception:
        cap = 128 * 1024 * 1024
    return max(32 * 1024 * 1024, min(cap // 2, 96 * 1024 * 1024))


# ----------------------- kernel 1: node projection (once) -----------------------

def _proj_kernel(x_ref, w_ref, o_ref):
    o_ref[...] = jnp.dot(x_ref[...], w_ref[...],
                         preferred_element_type=jnp.float32).astype(o_ref.dtype)


# ----------------------- kernel 2: fused GAT attention --------------------------

def _attention_kernel(vq_ref, vk_ref, e_ref, adj_ref, w2_ref, b2_ref,
                      asrc_ref, atgt_ref, aedge_ref, o_ref,
                      m_sc, l_sc, acc_sc, *, num_heads, f_out):
    """One (q_tile, k_tile) block: edge projection + GAT scores + online softmax +
    aggregation for ALL heads; output written once, lane-dense, at the last k tile."""
    f32 = jnp.float32
    ki = pl.program_id(1)
    nk = pl.num_programs(1)
    tq, tk, _ = e_ref.shape
    nhf = num_heads * f_out

    @pl.when(ki == 0)
    def _():
        m_sc[...] = jnp.full_like(m_sc, MINUS_BIG)
        l_sc[...] = jnp.zeros_like(l_sc)
        acc_sc[...] = jnp.zeros_like(acc_sc)

    vq = vq_ref[...].astype(f32)                        # (TQ, NHF) query projections
    vk = vk_ref[...].astype(f32)                        # (TK, NHF) key/value projections

    # Edge projection for this block, all heads in one MXU matmul (bf16-capable).
    ep = jnp.dot(e_ref[...].reshape(tq * tk, -1), w2_ref[...],
                 preferred_element_type=f32) + b2_ref[...]
    ep = _leaky(ep)                                      # (TQ*TK, NHF)
    # Hoisted single VPU multiply by a_edge for all heads; per-head lane reduce below.
    epw3 = (ep * aedge_ref[...]).reshape(tq, tk, nhf)

    # Hoisted a_src / a_tgt multiplies (all heads at once, outside the head loop).
    vq_s = vq * asrc_ref[...]                            # (TQ, NHF)
    vk_t = vk * atgt_ref[...]                            # (TK, NHF)

    # int8 adjacency -> additive connectivity mask (0 / -1e9), in-kernel (4x less HBM).
    madd = jnp.where(adj_ref[...] != 0, 0.0, NEG_INF)    # (TQ, TK)

    m_prev_all = m_sc[...]
    l_prev_all = l_sc[...]
    acc_prev_all = acc_sc[...]

    new_m, new_l, new_acc = [], [], []
    for h in range(num_heads):                           # NH small & static -> unrolled
        sl = slice(h * f_out, (h + 1) * f_out)
        hs = slice(h, h + 1)

        s_src = jnp.sum(vq_s[:, sl], axis=-1, keepdims=True)        # (TQ, 1)
        s_tgt = jnp.sum(vk_t[:, sl], axis=-1)[None, :]              # (1, TK)
        es = jnp.sum(epw3[:, :, sl], axis=-1)                       # (TQ, TK)
        logits = _leaky(s_src + s_tgt) + _leaky(es) + madd          # (TQ, TK)

        # Online softmax update for this head (exact; leaky(es) is elementwise so
        # per-key-tile application is identical to the monolithic softmax).
        m_prev = m_prev_all[:, hs]
        m_new = jnp.maximum(m_prev, jnp.max(logits, axis=-1, keepdims=True))
        alpha = jnp.exp(m_prev - m_new)
        p = jnp.exp(logits - m_new)
        new_m.append(m_new)
        new_l.append(alpha * l_prev_all[:, hs] + jnp.sum(p, axis=-1, keepdims=True))
        new_acc.append(alpha * acc_prev_all[:, sl]
                       + jnp.dot(p, vk[:, sl], preferred_element_type=f32))

    # Full-width scratch stores (no per-head masked partial stores).
    m_all = jnp.concatenate(new_m, axis=-1)
    l_all = jnp.concatenate(new_l, axis=-1)
    acc_all = jnp.concatenate(new_acc, axis=-1)
    m_sc[...] = m_all
    l_sc[...] = l_all
    acc_sc[...] = acc_all

    @pl.when(ki == nk - 1)
    def _():
        inv_l = pl.reciprocal(l_all, approx=True)        # EUP slot, ~1e-4 rel err
        parts = [acc_all[:, h * f_out:(h + 1) * f_out] * inv_l[:, h:h + 1]
                 for h in range(num_heads)]
        # ONE lane-dense full-width store of the concatenated (TQ, NH*F_out) block.
        o_ref[...] = jnp.concatenate(parts, axis=-1).astype(o_ref.dtype)


# ----------------------- kernel 3: skip + BN + bias + ELU ------------------------

def _bn_bias_elu(y, gamma, beta, bias):
    inv_rows = 1.0 / (y.shape[0] + 1.0)                  # batch includes one zero pad row
    mean = jnp.sum(y, axis=0, keepdims=True) * inv_rows
    d = y - mean
    # centered (two-pass) variance; zero pad row contributes (0 - mean)^2.
    var = (jnp.sum(d * d, axis=0, keepdims=True) + mean * mean) * inv_rows
    out = d * jax.lax.rsqrt(var + BN_EPS) * gamma + beta + bias
    return jnp.where(out > 0, out, jnp.exp(out) - 1.0)   # ELU(alpha=1)


def _finalize_proj_kernel(y_ref, x_ref, ws_ref, gamma_ref, beta_ref, bias_ref, o_ref):
    y = y_ref[...] + jnp.dot(x_ref[...], ws_ref[...], preferred_element_type=jnp.float32)
    o_ref[...] = _bn_bias_elu(y, gamma_ref[...], beta_ref[...], bias_ref[...])


def _finalize_identity_kernel(y_ref, x_ref, gamma_ref, beta_ref, bias_ref, o_ref,
                              *, num_heads):
    # `out += in.unsqueeze(1)` -> broadcast-add x across heads; no identity matmul,
    # no (f_in, NH*f_in) weight DMA.
    y = y_ref[...] + jnp.concatenate([x_ref[...]] * num_heads, axis=-1)
    o_ref[...] = _bn_bias_elu(y, gamma_ref[...], beta_ref[...], bias_ref[...])


# --------------------------------- wrapper ---------------------------------------

def instgnn_imp2_forward(x, e, adj, params, num_heads, f_out, *,
                         compute_dtype=jnp.float32, q_tile=None, k_tile=None):
    """x: (N, F_in), e: (N, N, F_edge), adj: (N, N) bool/int (nonzero = connected,
    i.e. connectivity_mask = where(adj, 0, -1e9))."""
    N, f_in = x.shape
    f_edge = e.shape[-1]
    nhf = num_heads * f_out

    # TODO(synk): nn.Dropout(p=0.6) is identity here (inference semantics).

    # Tile selection: k_tile must be a multiple of 128 (adjacency lane dim) or N;
    # keep >=2 q tiles when possible so the v7x megacore "parallel" axis has work.
    if N % 128 == 0:
        if k_tile is None:
            k_tile = 128
        if q_tile is None:
            q_tile = 128 if N >= 256 else max(N // 2, 8)
    else:
        # TODO(synk): pad N to a sublane/lane multiple for large graphs not divisible
        # by 128; at small N a single whole-graph tile is fine.
        q_tile = q_tile or N
        k_tile = k_tile or N
    assert N % q_tile == 0 and N % k_tile == 0
    nq, nk = N // q_tile, N // k_tile

    vmem_limit = _vmem_limit_bytes()

    cdt = compute_dtype
    # NOTE: the wrapper-side astype is itself an HBM pass; bf16 only pays off if the
    # producer emits bf16 e/x or the layer is reused.  Default stays f32.
    xc = x.astype(cdt)
    ec = e.astype(cdt)
    w1 = params["W1T"].astype(cdt)
    w2 = params["W2T"].astype(cdt)
    b2 = params["b2"].reshape(1, nhf).astype(jnp.float32)
    a_src = params["a_src"].reshape(1, nhf).astype(jnp.float32)
    a_tgt = params["a_tgt"].reshape(1, nhf).astype(jnp.float32)
    a_edge = params["a_edge"].reshape(1, nhf).astype(jnp.float32)
    adj_i8 = adj.astype(jnp.int8)

    # 1) Node projection once (removes n_tiles-1 redundant matmuls + one DMA stream
    #    per attention grid step).
    vproj = pl.pallas_call(
        _proj_kernel,
        out_shape=jax.ShapeDtypeStruct((N, nhf), jnp.float32),
        grid=(nq,),
        in_specs=[pl.BlockSpec((q_tile, f_in), lambda i: (i, 0)),
                  pl.BlockSpec((f_in, nhf), lambda i: (0, 0))],
        out_specs=pl.BlockSpec((q_tile, nhf), lambda i: (i, 0)),
        compiler_params=pltpu.CompilerParams(
            dimension_semantics=("parallel",), vmem_limit_bytes=vmem_limit),
    )(xc, w1)

    # 2) Fused attention: edge projection + GAT scores + online softmax + aggregation.
    kern = functools.partial(_attention_kernel, num_heads=num_heads, f_out=f_out)
    attn_out = pl.pallas_call(
        kern,
        out_shape=jax.ShapeDtypeStruct((N, nhf), jnp.float32),
        grid=(nq, nk),
        in_specs=[
            pl.BlockSpec((q_tile, nhf), lambda q, k: (q, 0)),              # vproj (queries)
            pl.BlockSpec((k_tile, nhf), lambda q, k: (k, 0)),              # vproj (keys/vals)
            pl.BlockSpec((q_tile, k_tile, f_edge), lambda q, k: (q, k, 0)),# edge block
            pl.BlockSpec((q_tile, k_tile), lambda q, k: (q, k)),           # adjacency int8
            pl.BlockSpec((f_edge, nhf), lambda q, k: (0, 0)),              # W2
            pl.BlockSpec((1, nhf), lambda q, k: (0, 0)),                   # b2
            pl.BlockSpec((1, nhf), lambda q, k: (0, 0)),                   # a_src
            pl.BlockSpec((1, nhf), lambda q, k: (0, 0)),                   # a_tgt
            pl.BlockSpec((1, nhf), lambda q, k: (0, 0)),                   # a_edge
        ],
        out_specs=pl.BlockSpec((q_tile, nhf), lambda q, k: (q, 0)),        # lane-dense out
        scratch_shapes=[pltpu.VMEM((q_tile, num_heads), jnp.float32),      # running max
                        pltpu.VMEM((q_tile, num_heads), jnp.float32),      # running sum
                        pltpu.VMEM((q_tile, nhf), jnp.float32)],           # accumulator
        compiler_params=pltpu.CompilerParams(
            dimension_semantics=("parallel", "arbitrary"),
            vmem_limit_bytes=vmem_limit),
    )(vproj, vproj, ec, adj_i8, w2, b2, a_src, a_tgt, a_edge)

    # 3) Skip + zero-padded BatchNorm + bias + ELU (output aliases attn_out buffer).
    # TODO(synk): tile this kernel over rows (two-pass BN stats) once N*nhf outgrows VMEM.
    gamma = params["gamma"].reshape(1, nhf)
    beta = params["beta"].reshape(1, nhf)
    bias = params["bias"].reshape(1, nhf)
    x32 = x.astype(jnp.float32)

    if f_out == f_in:
        out = pl.pallas_call(
            functools.partial(_finalize_identity_kernel, num_heads=num_heads),
            out_shape=jax.ShapeDtypeStruct((N, nhf), jnp.float32),
            input_output_aliases={0: 0},
        )(attn_out, x32, gamma, beta, bias)
    else:
        out = pl.pallas_call(
            _finalize_proj_kernel,
            out_shape=jax.ShapeDtypeStruct((N, nhf), jnp.float32),
            input_output_aliases={0: 0},
        )(attn_out, x32, params["WsT"].astype(jnp.float32), gamma, beta, bias)
    return out


# --------------------------- params & pure-JAX reference -------------------------

def _xavier(key, shape, fan_in, fan_out):
    limit = (6.0 / (fan_in + fan_out)) ** 0.5
    return jax.random.uniform(key, shape, jnp.float32, -limit, limit)


def init_params(key, f_in, f_edge, f_out, nh):
    nhf = nh * f_out
    ks = jax.random.split(key, 7)
    W1 = _xavier(ks[0], (nhf, f_in), f_in, nhf)      # linear_proj.weight  (no bias)
    W2 = _xavier(ks[1], (nhf, f_edge), f_edge, nhf)  # linear_proj2.weight
    b2 = jax.random.uniform(ks[2], (nhf,), jnp.float32,
                            -1.0 / f_edge ** 0.5, 1.0 / f_edge ** 0.5)  # linear_proj2.bias
    Ws = _xavier(ks[3], (nhf, f_in), f_in, nhf)      # skip_proj.weight (no bias)
    a_src = _xavier(ks[4], (nh, f_out), f_out, nh)   # scoring_fn_source (1,NH,F)
    a_tgt = _xavier(ks[5], (nh, f_out), f_out, nh)   # scoring_fn_target (1,NH,F)
    a_edge = _xavier(ks[6], (nh, f_out), f_out, nh)  # scoring_edge_fn_target (1,1,NH,F)
    return {
        "W1T": W1.T, "W2T": W2.T, "b2": b2, "WsT": Ws.T,
        "a_src": a_src, "a_tgt": a_tgt, "a_edge": a_edge,
        "gamma": jnp.ones((nhf,), jnp.float32),      # BatchNorm weight
        "beta": jnp.zeros((nhf,), jnp.float32),      # BatchNorm bias
        "bias": jnp.zeros((nhf,), jnp.float32),      # layer bias (init zeros)
    }


def reference_forward(x, e, mask, p, nh, f_out):
    """Pure-JAX transcription of InstGNNLayerImp2.forward (eval mode)."""
    N, f_in = x.shape
    nhf = nh * f_out
    leaky = lambda z: jnp.where(z > 0, z, LEAKY_SLOPE * z)
    nproj = (x @ p["W1T"]).reshape(N, nh, f_out)
    eproj = leaky((e.reshape(-1, e.shape[-1]) @ p["W2T"] + p["b2"]).reshape(N, N, nh, f_out))
    ssrc = jnp.sum(nproj * p["a_src"][None], -1, keepdims=True)
    stgt = jnp.sum(nproj * p["a_tgt"][None], -1, keepdims=True)
    sedge = jnp.sum(eproj * p["a_edge"][None, None], -1)
    ssrc = jnp.transpose(ssrc, (1, 0, 2))        # (NH, N, 1)
    stgt = jnp.transpose(stgt, (1, 2, 0))        # (NH, 1, N)
    sedge = jnp.transpose(sedge, (2, 0, 1))      # (NH, N, N)
    attn = jax.nn.softmax(leaky(ssrc + stgt) + leaky(sedge) + mask[None], axis=-1)
    out = jnp.einsum("hij,hjf->hif", attn, jnp.transpose(nproj, (1, 0, 2)))
    out = jnp.transpose(out, (1, 0, 2))          # (N, NH, F)
    if f_out == f_in:
        out = out + x[:, None, :]
    else:
        out = out + (x @ p["WsT"]).reshape(N, nh, f_out)
    out = out.reshape(N, nhf)
    padded = jnp.concatenate([out, jnp.zeros((1, nhf), out.dtype)], axis=0)
    mean, var = padded.mean(0), padded.var(0)
    padded = (padded - mean) / jnp.sqrt(var + BN_EPS) * p["gamma"] + p["beta"]
    out = padded[:-1] + p["bias"]
    return jnp.where(out > 0, out, jnp.exp(out) - 1.0)


# ------------------------------------ main ---------------------------------------

if __name__ == "__main__":
    root_key = jax.random.PRNGKey(0)
    key_case1, key_case2 = jax.random.split(root_key)

    def run_case(case_key, f_in, f_edge, f_out, nh, n):
        kx, ke, ka, kp = jax.random.split(case_key, 4)
        x = jax.random.normal(kx, (n, f_in), dtype=jnp.float32)
        e = jax.random.normal(ke, (n, n, f_edge), dtype=jnp.float32)
        adj = jax.random.bernoulli(ka, 0.5, (n, n)) | jnp.eye(n, dtype=bool)
        mask = jnp.where(adj, 0.0, NEG_INF).astype(jnp.float32)   # additive mask (ref)
        params = init_params(kp, f_in, f_edge, f_out, nh)
        ref = reference_forward(x, e, mask, params, nh, f_out)
        out = instgnn_imp2_forward(x, e, adj, params, nh, f_out)
        out = jax.block_until_ready(out)
        assert out.shape == (n, nh * f_out)
        err = float(jnp.max(jnp.abs(out - ref)))
        assert jnp.allclose(out, ref, atol=5e-3, rtol=5e-3), f"max abs err {err}"
        return x, e, adj, params, ref

    # Case 1: projection-skip path (F_out != F_in), exact f32 check.
    N, F_IN, F_EDGE, F_OUT, NH = 8, 16, 12, 8, 4
    x, e, adj, params, ref = run_case(key_case1, F_IN, F_EDGE, F_OUT, NH, N)

    # Case 2: identity-skip path (F_out == F_in) exercises the broadcast-add finalize.
    run_case(key_case2, 16, 12, 16, 4, 8)

    # Case 3: bf16 MXU path (f32 accumulation) on case-1 data: coarse sanity only.
    out_bf = instgnn_imp2_forward(x, e, adj, params, NH, F_OUT,
                                  compute_dtype=jnp.bfloat16)
    out_bf = jax.block_until_ready(out_bf)
    assert bool(jnp.all(jnp.isfinite(out_bf)))
    assert float(jnp.max(jnp.abs(out_bf - ref))) < 1.0

    print("KERNEL_OK")
</pallas_src>

<mosaic_0001>
module attributes {stable_mosaic.version = 11 : i64} {
  func.func @_proj_kernel(%arg0: i32, %arg1: memref<8x16xf32, #tpu.memory_space<vmem>>, %arg2: memref<16x32xf32, #tpu.memory_space<vmem>>, %arg3: memref<8x32xf32, #tpu.memory_space<vmem>>) attributes {dimension_semantics = [#tpu.dimension_semantics<parallel>], iteration_bounds = array<i64: 1>, scalar_prefetch = 0 : i64, scratch_operands = 0 : i64, tpu.core_type = #tpu.core_type<tc>, window_params = [{transform_indices = @transform_0, window_bounds = array<i64: 8, 16>}, {pipeline_mode = #tpu.pipeline_mode<synchronous>, transform_indices = @transform_1, window_bounds = array<i64: 16, 32>}, {transform_indices = @transform_2, window_bounds = array<i64: 8, 32>}]} {
    %c0 = arith.constant 0 : index
    %c0_0 = arith.constant 0 : index
    %0 = vector.load %arg1[%c0, %c0_0] : memref<8x16xf32, #tpu.memory_space<vmem>>, vector<8x16xf32>
    %c0_1 = arith.constant 0 : index
    %c0_2 = arith.constant 0 : index
    %1 = vector.load %arg2[%c0_1, %c0_2] : memref<16x32xf32, #tpu.memory_space<vmem>>, vector<16x32xf32>
    %cst = arith.constant dense<0.000000e+00> : vector<8x32xf32>
    %2 = tpu.matmul %0, %1, %cst {dimension_numbers = #tpu.dot_dimension_numbers<[1], [0], [0], [1], [0, 0, 1, 1], [], []>} : vector<8x16xf32>, vector<16x32xf32>, vector<8x32xf32> -> vector<8x32xf32>
    %c0_3 = arith.constant 0 : index
    %c0_4 = arith.constant 0 : index
    %3 = vector.load %arg3[%c0_3, %c0_4] : memref<8x32xf32, #tpu.memory_space<vmem>>, vector<8x32xf32>
    tpu.vector_store %arg3[%c0_3, %c0_4], %2 {strides = array<i32>} : memref<8x32xf32, #tpu.memory_space<vmem>>, vector<8x32xf32>,
    return
  }
  func.func @transform_0(%arg0: i32) -> (i32, i32) {
    %c0_i32 = arith.constant 0 : i32
    %c0_i32_0 = arith.constant 0 : i32
    return %arg0, %c0_i32 : i32, i32
  }
  func.func @transform_1(%arg0: i32) -> (i32, i32) {
    %c0_i32 = arith.constant 0 : i32
    %c0_i32_0 = arith.constant 0 : i32
    %c0_i32_1 = arith.constant 0 : i32
    return %c0_i32, %c0_i32_0 : i32, i32
  }
  func.func @transform_2(%arg0: i32) -> (i32, i32) {
    %c0_i32 = arith.constant 0 : i32
    %c0_i32_0 = arith.constant 0 : i32
    return %arg0, %c0_i32 : i32, i32
  }
}

</mosaic_0001>

<llo_original>
// kernel: tpu_custom_call.1
$region0: #{tpu_custom_call.1}
  #allocation0 [shape = 'u32[]', space=smem, size = 0x4, offset = 0x4, fixed_abs, tag = 'smem constant byte address 0x4 - core index']
  #allocation1 [shape = 'u32[144,128]{1,0:T(1,128)}', space=vmem, size = 0x12000, scoped, tag = 'internal scratch']
  %s0 = inlined_call_operand.hbm [shape: f32[8,16], index: 0, kind: input, shape index: {}]
  %s1 = inlined_call_operand.hbm [shape: f32[16,32], index: 1, kind: input, shape index: {}]
  %s2 = inlined_call_operand.hbm [shape: f32[8,32], index: 2, kind: output, shape index: {}]
  %s3 = sld [smem:[#allocation0]]
  $region26: #{tpu_custom_call.1} parent=0
    _
  %s5 = ssub.s32 1, %s3
  %s6 = scalar_select 0, %s5, %s3
  $region1: #{tpu_custom_call.1} parent=0
    #allocation2 [shape = 'u8[4096]{0}', space=vmem, size = 0x1000, scoped, tag = 'input window, operand 0, single buffered']
    #allocation3 [shape = 's32[1]{0}', space=sflag, size = 0x4, scoped, tag = 'scoped memory for tpu_custom_call.1']
    #allocation4 [shape = 's32[1]{0}', space=sflag, size = 0x4, scoped, tag = 'scoped memory for tpu_custom_call.1']
    #allocation5 [shape = 'u8[8192]{0}', space=vmem, size = 0x2000, scoped, tag = 'input window, operand 1, single buffered']
    #allocation6 [shape = 's32[1]{0}', space=sflag, size = 0x4, scoped, tag = 'scoped memory for tpu_custom_call.1']
    #allocation7 [shape = 'u8[4096]{0}', space=vmem, size = 0x1000, scoped, tag = 'output window, operand 0, single buffered']
    %7 = vsyncpa [#allocation3], 0
    %8 = vsyncpa [#allocation6], 0
    %9 = vsyncpa [#allocation4], 0
    // Predicated region
    $region2: #{tpu_custom_call.1} parent=1 // pred_check
      _
    $region3: #{tpu_custom_call.1} parent=1 // pred_check_branch
      %11 = sbr.rel (0) target = $region5
    $region4: #{tpu_custom_call.1} parent=1 // pred_region
      %s13 = ssub.s32 128, 128
      %14 = vsyncadd [#allocation3], %s13
      %s16 = sshll.u32 [#allocation2], 4
      %s17 = int_to_ptr.vmem [resolvable:$true] %s16
      %19 = dma.hbm_to_vmem [thread:$0]  %s0, 128, %s17, [#allocation3]
    $region5: #{tpu_custom_call.1} parent=1 // pred_fallthru
      _
    // Predicated region
    $region6: #{tpu_custom_call.1} parent=1 // pred_check
      _
    $region7: #{tpu_custom_call.1} parent=1 // pred_check_branch
      %21 = sbr.rel (0) target = $region9
    $region8: #{tpu_custom_call.1} parent=1 // pred_region
      %s23 = ssub.s32 256, 256
      %24 = vsyncadd [#allocation6], %s23
      %s25 = sshll.u32 [#allocation5], 4
      %s26 = int_to_ptr.vmem [resolvable:$true] %s25
      %31 = dma.hbm_to_vmem [thread:$0]  %s1, 256, %s26, [#allocation6], 128, 128, 8
    $region9: #{tpu_custom_call.1} parent=1 // pred_fallthru
      _
    // Predicated region
    $region10: #{tpu_custom_call.1} parent=1 // pred_check
      _
    $region11: #{tpu_custom_call.1} parent=1 // pred_check_branch
      %33 = sbr.rel (0) target = $region13
    $region12: #{tpu_custom_call.1} parent=1 // pred_region
      %34 = dma.done [#allocation3], 128
    $region13: #{tpu_custom_call.1} parent=1 // pred_fallthru
      _
    // Predicated region
    $region14: #{tpu_custom_call.1} parent=1 // pred_check
      _
    $region15: #{tpu_custom_call.1} parent=1 // pred_check_branch
      %36 = sbr.rel (0) target = $region17
    $region16: #{tpu_custom_call.1} parent=1 // pred_region
      %37 = dma.done [#allocation6], 256
    $region17: #{tpu_custom_call.1} parent=1 // pred_fallthru
      _
    %v38 = vld [vmem:[#allocation2] sm:$0xff]
    %v39 = vld [vmem:[#allocation5] sm:$0xff]
    %v40 = vld [vmem:[#allocation5 + $0x8] sm:$0xff]
    %vm41 = vcmask 130048
    %v43 = vsel %vm41, %v38, 0
    %45 = vmatprep.subr.mxu0 0.0
    %46 = vmatpush1.msra.mxu0 %v39
    %47 = vmatprep.subr.mxu0 0.0
    %48 = vmatpush1.msra.mxu0 %v40
    %49 = vmatprep.subr.mxu0 0.0
    %50 = vmatpush1.msra.mxu0 0.0
    %51 = vmatprep.subr.mxu0 0.0
    %52 = vmatpush1.msra.mxu0 0.0
    %53 = vmatprep.subr.mxu0 0.0
    %54 = vmatpush1.msra.mxu0 0.0
    %55 = vmatprep.subr.mxu0 0.0
    %56 = vmatpush1.msra.mxu0 0.0
    %57 = vmatprep.subr.mxu0 0.0
    %58 = vmatpush1.msra.mxu0 0.0
    %59 = vmatprep.subr.mxu0 0.0
    %60 = vmatpush1.msra.mxu0 0.0
    %61 = vmatprep.subr.mxu0 0.0
    %62 = vmatpush1.msra.mxu0 0.0
    %63 = vmatprep.subr.mxu0 0.0
    %64 = vmatpush1.msra.mxu0 0.0
    %65 = vmatprep.subr.mxu0 0.0
    %66 = vmatpush1.msra.mxu0 0.0
    %67 = vmatprep.subr.mxu0 0.0
    %68 = vmatpush1.msra.mxu0 0.0
    %69 = vmatprep.subr.mxu0 0.0
    %70 = vmatpush1.msra.mxu0 0.0
    %71 = vmatprep.subr.mxu0 0.0
    %72 = vmatpush1.msra.mxu0 0.0
    %73 = vmatprep.subr.mxu0 0.0
    %74 = vmatpush1.msra.mxu0 0.0
    %75 = vmatprep.subr.mxu0 0.0
    %76 = vmatpush1.msra.mxu0 0.0
    %77 = vmatprep.subr.mxu0 0.0
    %78 = vmatpush1.msra.mxu0 0.0
    %79 = vmatprep.subr.mxu0 0.0
    %80 = vmatpush1.msra.mxu0 0.0
    %81 = vmatprep.subr.mxu0 0.0
    %82 = vmatpush1.msra.mxu0 0.0
    %83 = vmatprep.subr.mxu0 0.0
    %84 = vmatpush1.msra.mxu0 0.0
    %85 = vmatprep.subr.mxu0 0.0
    %86 = vmatpush1.msra.mxu0 0.0
    %87 = vmatprep.subr.mxu0 0.0
    %88 = vmatpush1.msra.mxu0 0.0
    %89 = vmatprep.subr.mxu0 0.0
    %90 = vmatpush1.msra.mxu0 0.0
    %91 = vmatprep.subr.mxu0 0.0
    %92 = vmatpush1.msra.mxu0 0.0
    %93 = vmatprep.subr.mxu0 0.0
    %94 = vmatpush1.msra.mxu0 0.0
    %95 = vmatprep.subr.mxu0 0.0
    %96 = vmatpush1.msra.mxu0 0.0
    %97 = vmatprep.subr.mxu0 0.0
    %98 = vmatpush1.msra.mxu0 0.0
    %99 = vmatprep.subr.mxu0 0.0
    %100 = vmatpush1.msra.mxu0 0.0
    %101 = vmatprep.subr.mxu0 0.0
    %102 = vmatpush1.msra.mxu0 0.0
    %103 = vmatprep.subr.mxu0 0.0
    %104 = vmatpush1.msra.mxu0 0.0
    %105 = vmatprep.subr.mxu0 0.0
    %106 = vmatpush1.msra.mxu0 0.0
    %107 = vmatprep.subr.mxu0 0.0
    %108 = vmatpush1.msra.mxu0 0.0
    %109 = vmatprep.mubr.f32.mxu0 0.0
    %110 = vmatmul.mubr.f32.gmra.mrb[0].mxu0 %v43
    %v111 = vpop.f32.mrb[0].mxu0
    %v112 = vadd.f32 0.0, %v111
    %v113 = vpop.f32.mrb[0].mxu0
    %114 = vdwg.mxu0
    %vm115 = vcmask 261120
    %116 = vst.msk [vmem:[#allocation7] sm:$0xff] %vm115, %v112
    // Predicated region
    $region18: #{tpu_custom_call.1} parent=1 // pred_check
      _
    $region19: #{tpu_custom_call.1} parent=1 // pred_check_branch
      %118 = sbr.rel (0) target = $region21
    $region20: #{tpu_custom_call.1} parent=1 // pred_region
      %s120 = ssub.s32 128, 128
      %121 = vsyncadd [#allocation4], %s120
      %s123 = sshll.u32 [#allocation7], 4
      %s124 = int_to_ptr.vmem [resolvable:$true] %s123
      %126 = dma.vmem_to_hbm [thread:$0]  %s124, 128, %s2, [#allocation4]
    $region21: #{tpu_custom_call.1} parent=1 // pred_fallthru
      _
    // Predicated region
    $region22: #{tpu_custom_call.1} parent=1 // pred_check
      _
    $region23: #{tpu_custom_call.1} parent=1 // pred_check_branch
      %128 = sbr.rel (0) target = $region25
    $region24: #{tpu_custom_call.1} parent=1 // pred_region
      %129 = dma.done [#allocation4], 128
    $region25: #{tpu_custom_call.1} parent=1 // pred_fallthru
      _
    %130 = vsyncpa [#allocation3], 1
    %131 = vsyncpa [#allocation6], 1
    %132 = vsyncpa [#allocation4], 1

</llo_original>
